<compile_context>
chip_gen: v5e
topology: v5e:2x2
jax: 0.10.0
libtpu: 0.0.40
codegen_flags: <defaults>
</compile_context>

<pallas_src>
import jax
import jax.numpy as jnp
from jax import lax
from jax.experimental import pallas as pl
from jax.experimental.pallas import tpu as pltpu


IN_FEATURES = 9   # 3 (eyebrow) + 6 (mouth)
LN_EPS = 1e-6


def _round_up(x, m):
    return ((x + m - 1) // m) * m


def _choose_block_b(B, D, in_itemsize, num_classes,
                    vmem_budget_bytes=16 << 20, max_block_b=1024):
    """VMEM-budget-driven batch tile (rows, multiple of 8)."""
    # Per-row footprint: double-buffered gcn/eyebrow/mouth input tiles,
    # double-buffered output tile, plus a few f32 temporaries per node slice.
    per_row = (2 * (IN_FEATURES + 2) * D * in_itemsize  # inputs, 2 pipeline bufs
               + 2 * num_classes * 4                    # output, 2 pipeline bufs
               + 4 * D * 4)                             # in-kernel f32 temporaries
    cap = max(8, min(max_block_b, vmem_budget_bytes // max(per_row, 1)))
    cap -= cap % 8
    cap = max(cap, 8)
    # Keep >= 2 grid steps so v7x's two TensorCores both get work and the
    # BlockSpec pipeline actually overlaps DMA with compute.
    if B >= 16:
        half = max(8, (B // 2) // 8 * 8)
        cap = min(cap, half)
    # Prefer a multiple-of-8 divisor of B: no batch padding / tail copy.
    if B % 8 == 0:
        tb = min(cap, B)
        while tb >= 8:
            if B % tb == 0:
                return tb
            tb -= 8
    return min(cap, _round_up(B, 8))


def au_fusion_kernel(eyebrow_ref, mouth_ref, gcn_ref, gamma_ref, beta_ref,
                     w_ref, bias_ref, out_ref):
    D = eyebrow_ref.shape[-1]
    num_classes = out_ref.shape[-1]

    eyebrow = eyebrow_ref[...].astype(jnp.float32)   # (TB, D)
    mouth = mouth_ref[...].astype(jnp.float32)       # (TB, D)

    # features[b, k] = sum_d (eyebrow if k < 3 else mouth)[b, d] * gcn[b, k, d]
    # One multiply + one lane reduction per node; the eyebrow/mouth choice is
    # static per node, so no runtime select over the dominant stream, and the
    # f32 upcast is fused into the per-node multiply (no full f32 gcn copy).
    # TODO(synk): if D is not a multiple of 128 the static lane windows below
    # may relayout; correctness is unaffected.
    cols = []
    for k in range(IN_FEATURES):
        src = eyebrow if k < 3 else mouth
        g_k = gcn_ref[:, k * D:(k + 1) * D].astype(jnp.float32)   # (TB, D)
        cols.append(jnp.sum(src * g_k, axis=-1, keepdims=True))   # (TB, 1)
    features = jnp.concatenate(cols, axis=-1)                     # (TB, 9)

    # LayerNorm over the 9 nodes (biased variance, eps inside rsqrt — matches
    # torch.nn.LayerNorm).
    mean = jnp.mean(features, axis=-1, keepdims=True)
    centered = features - mean
    var = jnp.mean(centered * centered, axis=-1, keepdims=True)
    normed = centered * lax.rsqrt(var + LN_EPS)
    normed = normed * gamma_ref[...] + beta_ref[...]              # (TB, 9)

    # Tiny (TB,9) x (9,NC_PAD) matmul on the otherwise-idle MXU; the stored
    # output stays unpadded (masked store once per tile is negligible).
    prod = jnp.dot(normed, w_ref[...], preferred_element_type=jnp.float32)
    out_ref[...] = (prod[:, :num_classes] + bias_ref[...]).astype(out_ref.dtype)


def au_fusion(eyebrow, mouth, gcn, ln_weight, ln_bias, lin_weight, lin_bias,
              *, block_b=None, vmem_budget_bytes=16 << 20):
    """eyebrow/mouth: (B, D); gcn: (B, 9, D); lin_weight: (num_classes, 9)."""
    B, D = eyebrow.shape
    assert mouth.shape == (B, D)
    assert gcn.shape == (B, IN_FEATURES, D)
    num_classes = lin_weight.shape[0]
    nc_pad = _round_up(num_classes, 128)          # lane-padded W for the MXU dot
    in_itemsize = jnp.dtype(gcn.dtype).itemsize

    if block_b is None:
        block_b = _choose_block_b(B, D, in_itemsize, num_classes,
                                  vmem_budget_bytes=vmem_budget_bytes)
    block_b = max(8, block_b - block_b % 8)

    # Flatten gcn -> (B, 9*D): removes 9->16 sublane padding on the dominant
    # double-buffered VMEM block (free reshape for contiguous data).
    gcn2d = gcn.reshape(B, IN_FEATURES * D)

    # Pad the batch to a multiple of block_b (only copies when B is awkward);
    # padded rows are zeros -> LayerNorm stays finite, rows sliced off below.
    B_pad = _round_up(B, block_b)
    if B_pad != B:
        pad = B_pad - B
        eyebrow = jnp.pad(eyebrow, ((0, pad), (0, 0)))
        mouth = jnp.pad(mouth, ((0, pad), (0, 0)))
        gcn2d = jnp.pad(gcn2d, ((0, pad), (0, 0)))
    grid = (B_pad // block_b,)

    # Tiny parameter prep (once; negligible vs. the B*9*D input stream).
    gamma = ln_weight.reshape(1, IN_FEATURES).astype(jnp.float32)
    beta = ln_bias.reshape(1, IN_FEATURES).astype(jnp.float32)
    w_pad = jnp.zeros((IN_FEATURES, nc_pad), jnp.float32)
    w_pad = w_pad.at[:, :num_classes].set(lin_weight.T.astype(jnp.float32))
    bias2d = lin_bias.astype(jnp.float32).reshape(1, num_classes)

    cost = pl.CostEstimate(
        flops=2 * B_pad * IN_FEATURES * D + 2 * B_pad * IN_FEATURES * nc_pad,
        transcendentals=B_pad,
        bytes_accessed=(eyebrow.size + mouth.size + gcn2d.size) * in_itemsize
        + B_pad * num_classes * 4,
    )

    out = pl.pallas_call(
        au_fusion_kernel,
        out_shape=jax.ShapeDtypeStruct((B_pad, num_classes), jnp.float32),
        grid=grid,
        in_specs=[
            pl.BlockSpec((block_b, D), lambda i: (i, 0)),                 # eyebrow
            pl.BlockSpec((block_b, D), lambda i: (i, 0)),                 # mouth
            pl.BlockSpec((block_b, IN_FEATURES * D), lambda i: (i, 0)),   # gcn (flat)
            pl.BlockSpec((1, IN_FEATURES), lambda i: (0, 0)),             # gamma
            pl.BlockSpec((1, IN_FEATURES), lambda i: (0, 0)),             # beta
            pl.BlockSpec((IN_FEATURES, nc_pad), lambda i: (0, 0)),        # W^T (padded)
            pl.BlockSpec((1, num_classes), lambda i: (0, 0)),             # bias
        ],
        out_specs=pl.BlockSpec((block_b, num_classes), lambda i: (i, 0)),
        compiler_params=pltpu.CompilerParams(
            dimension_semantics=("parallel",),
            vmem_limit_bytes=32 << 20),
        cost_estimate=cost,
    )(eyebrow, mouth, gcn2d, gamma, beta, w_pad, bias2d)

    return out[:B] if B_pad != B else out


def au_fusion_reference(eyebrow, mouth, gcn, ln_weight, ln_bias,
                        lin_weight, lin_bias):
    """Pure-JAX reference mirroring the PyTorch loop (vectorized)."""
    feats_e = jnp.einsum("bd,bkd->bk", eyebrow, gcn[:, :3, :])
    feats_m = jnp.einsum("bd,bkd->bk", mouth, gcn[:, 3:, :])
    feats = jnp.concatenate([feats_e, feats_m], axis=-1)       # (B, 9)
    mean = jnp.mean(feats, axis=-1, keepdims=True)
    var = jnp.mean((feats - mean) ** 2, axis=-1, keepdims=True)
    feats = (feats - mean) / jnp.sqrt(var + LN_EPS) * ln_weight + ln_bias
    return feats @ lin_weight.T + lin_bias


if __name__ == "__main__":
    key = jax.random.PRNGKey(0)
    k1, k2, k3, k4, k5, k6, k7 = jax.random.split(key, 7)

    B = 16             # batch
    D = 128            # GCN node feature dim (lane-dense)
    NUM_CLASSES = 4

    eyebrow = jax.random.normal(k1, (B, D), dtype=jnp.float32)
    mouth = jax.random.normal(k2, (B, D), dtype=jnp.float32)
    gcn = jax.random.normal(k3, (B, IN_FEATURES, D), dtype=jnp.float32)

    ln_weight = 1.0 + 0.1 * jax.random.normal(k6, (IN_FEATURES,), dtype=jnp.float32)
    ln_bias = 0.05 * jax.random.normal(k7, (IN_FEATURES,), dtype=jnp.float32)
    lin_weight = 0.1 * jax.random.normal(
        k4, (NUM_CLASSES, IN_FEATURES), dtype=jnp.float32)
    lin_bias = 0.01 * jax.random.normal(k5, (NUM_CLASSES,), dtype=jnp.float32)

    # Auto block_b -> 8 rows, grid of 2 batch tiles (pipelined + megacore path).
    out = au_fusion(eyebrow, mouth, gcn, ln_weight, ln_bias,
                    lin_weight, lin_bias)
    out = jax.block_until_ready(out)

    ref = au_fusion_reference(eyebrow, mouth, gcn, ln_weight, ln_bias,
                              lin_weight, lin_bias)
    assert out.shape == (B, NUM_CLASSES)
    assert jnp.allclose(out, ref, atol=1e-4, rtol=1e-4), (out, ref)

    # Awkward batch size: exercises the pad-to-multiple-of-block path.
    B2 = 13
    out2 = au_fusion(eyebrow[:B2], mouth[:B2], gcn[:B2], ln_weight, ln_bias,
                     lin_weight, lin_bias)
    out2 = jax.block_until_ready(out2)
    assert out2.shape == (B2, NUM_CLASSES)
    assert jnp.allclose(out2, ref[:B2], atol=1e-4, rtol=1e-4), (out2, ref[:B2])

    print("KERNEL_OK")
</pallas_src>

<mosaic_0001>
module attributes {stable_mosaic.version = 11 : i64} {
  func.func @au_fusion_kernel(%arg0: i32, %arg1: memref<8x128xf32, #tpu.memory_space<vmem>>, %arg2: memref<8x128xf32, #tpu.memory_space<vmem>>, %arg3: memref<8x1152xf32, #tpu.memory_space<vmem>>, %arg4: memref<1x9xf32, #tpu.memory_space<vmem>>, %arg5: memref<1x9xf32, #tpu.memory_space<vmem>>, %arg6: memref<9x128xf32, #tpu.memory_space<vmem>>, %arg7: memref<1x4xf32, #tpu.memory_space<vmem>>, %arg8: memref<8x4xf32, #tpu.memory_space<vmem>>) attributes {dimension_semantics = [#tpu.dimension_semantics<parallel>], iteration_bounds = array<i64: 2>, scalar_prefetch = 0 : i64, scratch_operands = 0 : i64, tpu.core_type = #tpu.core_type<tc>, window_params = [{transform_indices = @transform_0, window_bounds = array<i64: 8, 128>}, {transform_indices = @transform_1, window_bounds = array<i64: 8, 128>}, {transform_indices = @transform_2, window_bounds = array<i64: 8, 1152>}, {pipeline_mode = #tpu.pipeline_mode<synchronous>, transform_indices = @transform_3, window_bounds = array<i64: 1, 9>}, {pipeline_mode = #tpu.pipeline_mode<synchronous>, transform_indices = @transform_4, window_bounds = array<i64: 1, 9>}, {pipeline_mode = #tpu.pipeline_mode<synchronous>, transform_indices = @transform_5, window_bounds = array<i64: 9, 128>}, {pipeline_mode = #tpu.pipeline_mode<synchronous>, transform_indices = @transform_6, window_bounds = array<i64: 1, 4>}, {transform_indices = @transform_7, window_bounds = array<i64: 8, 4>}]} {
    %c0 = arith.constant 0 : index
    %c0_0 = arith.constant 0 : index
    %0 = vector.load %arg1[%c0, %c0_0] : memref<8x128xf32, #tpu.memory_space<vmem>>, vector<8x128xf32>
    %c0_1 = arith.constant 0 : index
    %c0_2 = arith.constant 0 : index
    %1 = vector.load %arg2[%c0_1, %c0_2] : memref<8x128xf32, #tpu.memory_space<vmem>>, vector<8x128xf32>
    %c0_3 = arith.constant 0 : index
    %c0_4 = arith.constant 0 : index
    %2 = vector.load %arg3[%c0_3, %c0_4] : memref<8x1152xf32, #tpu.memory_space<vmem>>, vector<8x128xf32>
    %3 = arith.mulf %0, %2 : vector<8x128xf32>
    %cst = arith.constant dense<0.000000e+00> : vector<8xf32>
    %4 = vector.multi_reduction <add>, %3, %cst [1] : vector<8x128xf32> to vector<8xf32>
    %5 = vector.shape_cast %4 : vector<8xf32> to vector<8x1xf32>
    %c0_5 = arith.constant 0 : index
    %c128 = arith.constant 128 : index
    %6 = vector.load %arg3[%c0_5, %c128] : memref<8x1152xf32, #tpu.memory_space<vmem>>, vector<8x128xf32>
    %7 = arith.mulf %0, %6 : vector<8x128xf32>
    %cst_6 = arith.constant dense<0.000000e+00> : vector<8xf32>
    %8 = vector.multi_reduction <add>, %7, %cst_6 [1] : vector<8x128xf32> to vector<8xf32>
    %9 = vector.shape_cast %8 : vector<8xf32> to vector<8x1xf32>
    %c0_7 = arith.constant 0 : index
    %c256 = arith.constant 256 : index
    %10 = vector.load %arg3[%c0_7, %c256] : memref<8x1152xf32, #tpu.memory_space<vmem>>, vector<8x128xf32>
    %11 = arith.mulf %0, %10 : vector<8x128xf32>
    %cst_8 = arith.constant dense<0.000000e+00> : vector<8xf32>
    %12 = vector.multi_reduction <add>, %11, %cst_8 [1] : vector<8x128xf32> to vector<8xf32>
    %13 = vector.shape_cast %12 : vector<8xf32> to vector<8x1xf32>
    %c0_9 = arith.constant 0 : index
    %c384 = arith.constant 384 : index
    %14 = vector.load %arg3[%c0_9, %c384] : memref<8x1152xf32, #tpu.memory_space<vmem>>, vector<8x128xf32>
    %15 = arith.mulf %1, %14 : vector<8x128xf32>
    %cst_10 = arith.constant dense<0.000000e+00> : vector<8xf32>
    %16 = vector.multi_reduction <add>, %15, %cst_10 [1] : vector<8x128xf32> to vector<8xf32>
    %17 = vector.shape_cast %16 : vector<8xf32> to vector<8x1xf32>
    %c0_11 = arith.constant 0 : index
    %c512 = arith.constant 512 : index
    %18 = vector.load %arg3[%c0_11, %c512] : memref<8x1152xf32, #tpu.memory_space<vmem>>, vector<8x128xf32>
    %19 = arith.mulf %1, %18 : vector<8x128xf32>
    %cst_12 = arith.constant dense<0.000000e+00> : vector<8xf32>
    %20 = vector.multi_reduction <add>, %19, %cst_12 [1] : vector<8x128xf32> to vector<8xf32>
    %21 = vector.shape_cast %20 : vector<8xf32> to vector<8x1xf32>
    %c0_13 = arith.constant 0 : index
    %c640 = arith.constant 640 : index
    %22 = vector.load %arg3[%c0_13, %c640] : memref<8x1152xf32, #tpu.memory_space<vmem>>, vector<8x128xf32>
    %23 = arith.mulf %1, %22 : vector<8x128xf32>
    %cst_14 = arith.constant dense<0.000000e+00> : vector<8xf32>
    %24 = vector.multi_reduction <add>, %23, %cst_14 [1] : vector<8x128xf32> to vector<8xf32>
    %25 = vector.shape_cast %24 : vector<8xf32> to vector<8x1xf32>
    %c0_15 = arith.constant 0 : index
    %c768 = arith.constant 768 : index
    %26 = vector.load %arg3[%c0_15, %c768] : memref<8x1152xf32, #tpu.memory_space<vmem>>, vector<8x128xf32>
    %27 = arith.mulf %1, %26 : vector<8x128xf32>
    %cst_16 = arith.constant dense<0.000000e+00> : vector<8xf32>
    %28 = vector.multi_reduction <add>, %27, %cst_16 [1] : vector<8x128xf32> to vector<8xf32>
    %29 = vector.shape_cast %28 : vector<8xf32> to vector<8x1xf32>
    %c0_17 = arith.constant 0 : index
    %c896 = arith.constant 896 : index
    %30 = vector.load %arg3[%c0_17, %c896] : memref<8x1152xf32, #tpu.memory_space<vmem>>, vector<8x128xf32>
    %31 = arith.mulf %1, %30 : vector<8x128xf32>
    %cst_18 = arith.constant dense<0.000000e+00> : vector<8xf32>
    %32 = vector.multi_reduction <add>, %31, %cst_18 [1] : vector<8x128xf32> to vector<8xf32>
    %33 = vector.shape_cast %32 : vector<8xf32> to vector<8x1xf32>
    %c0_19 = arith.constant 0 : index
    %c1024 = arith.constant 1024 : index
    %34 = vector.load %arg3[%c0_19, %c1024] : memref<8x1152xf32, #tpu.memory_space<vmem>>, vector<8x128xf32>
    %35 = arith.mulf %1, %34 : vector<8x128xf32>
    %cst_20 = arith.constant dense<0.000000e+00> : vector<8xf32>
    %36 = vector.multi_reduction <add>, %35, %cst_20 [1] : vector<8x128xf32> to vector<8xf32>
    %37 = vector.shape_cast %36 : vector<8xf32> to vector<8x1xf32>
    %38 = tpu.concatenate %5, %9, %13, %17, %21, %25, %29, %33, %37 in 1 : vector<8x1xf32>, vector<8x1xf32>, vector<8x1xf32>, vector<8x1xf32>, vector<8x1xf32>, vector<8x1xf32>, vector<8x1xf32>, vector<8x1xf32>, vector<8x1xf32> -> vector<8x9xf32>
    %cst_21 = arith.constant dense<0.000000e+00> : vector<8xf32>
    %39 = vector.multi_reduction <add>, %38, %cst_21 [1] : vector<8x9xf32> to vector<8xf32>
    %40 = vector.shape_cast %39 : vector<8xf32> to vector<8x1xf32>
    %cst_22 = arith.constant 9.000000e+00 : f32
    %41 = vector.broadcast %cst_22 : f32 to vector<8x1xf32>
    %42 = arith.divf %40, %41 : vector<8x1xf32>
    %43 = vector.broadcast %42 : vector<8x1xf32> to vector<8x9xf32>
    %44 = arith.subf %38, %43 : vector<8x9xf32>
    %45 = arith.mulf %44, %44 : vector<8x9xf32>
    %cst_23 = arith.constant dense<0.000000e+00> : vector<8xf32>
    %46 = vector.multi_reduction <add>, %45, %cst_23 [1] : vector<8x9xf32> to vector<8xf32>
    %47 = vector.shape_cast %46 : vector<8xf32> to vector<8x1xf32>
    %cst_24 = arith.constant 9.000000e+00 : f32
    %48 = vector.broadcast %cst_24 : f32 to vector<8x1xf32>
    %49 = arith.divf %47, %48 : vector<8x1xf32>
    %cst_25 = arith.constant 9.99999997E-7 : f32
    %50 = vector.broadcast %cst_25 : f32 to vector<8x1xf32>
    %51 = arith.addf %49, %50 : vector<8x1xf32>
    %52 = math.rsqrt %51 : vector<8x1xf32>
    %53 = vector.broadcast %52 : vector<8x1xf32> to vector<8x9xf32>
    %54 = arith.mulf %44, %53 : vector<8x9xf32>
    %c0_26 = arith.constant 0 : index
    %c0_27 = arith.constant 0 : index
    %55 = vector.load %arg4[%c0_26, %c0_27] : memref<1x9xf32, #tpu.memory_space<vmem>>, vector<1x9xf32>
    %56 = vector.broadcast %55 : vector<1x9xf32> to vector<8x9xf32>
    %57 = arith.mulf %54, %56 : vector<8x9xf32>
    %c0_28 = arith.constant 0 : index
    %c0_29 = arith.constant 0 : index
    %58 = vector.load %arg5[%c0_28, %c0_29] : memref<1x9xf32, #tpu.memory_space<vmem>>, vector<1x9xf32>
    %59 = vector.broadcast %58 : vector<1x9xf32> to vector<8x9xf32>
    %60 = arith.addf %57, %59 : vector<8x9xf32>
    %c0_30 = arith.constant 0 : index
    %c0_31 = arith.constant 0 : index
    %61 = vector.load %arg6[%c0_30, %c0_31] : memref<9x128xf32, #tpu.memory_space<vmem>>, vector<9x128xf32>
    %cst_32 = arith.constant dense<0.000000e+00> : vector<8x128xf32>
    %62 = tpu.matmul %60, %61, %cst_32 {dimension_numbers = #tpu.dot_dimension_numbers<[1], [0], [0], [1], [0, 0, 1, 1], [], []>} : vector<8x9xf32>, vector<9x128xf32>, vector<8x128xf32> -> vector<8x128xf32>
    %63 = vector.extract_strided_slice %62 {offsets = [0, 0], sizes = [8, 4], strides = [1, 1]} : vector<8x128xf32> to vector<8x4xf32>
    %c0_33 = arith.constant 0 : index
    %c0_34 = arith.constant 0 : index
    %64 = vector.load %arg7[%c0_33, %c0_34] : memref<1x4xf32, #tpu.memory_space<vmem>>, vector<1x4xf32>
    %65 = vector.broadcast %64 : vector<1x4xf32> to vector<8x4xf32>
    %66 = arith.addf %63, %65 : vector<8x4xf32>
    %c0_35 = arith.constant 0 : index
    %c0_36 = arith.constant 0 : index
    %67 = vector.load %arg8[%c0_35, %c0_36] : memref<8x4xf32, #tpu.memory_space<vmem>>, vector<8x4xf32>
    tpu.vector_store %arg8[%c0_35, %c0_36], %66 {strides = array<i32>} : memref<8x4xf32, #tpu.memory_space<vmem>>, vector<8x4xf32>,
    return
  }
  func.func @transform_0(%arg0: i32) -> (i32, i32) {
    %c0_i32 = arith.constant 0 : i32
    %c0_i32_0 = arith.constant 0 : i32
    return %arg0, %c0_i32 : i32, i32
  }
  func.func @transform_1(%arg0: i32) -> (i32, i32) {
    %c0_i32 = arith.constant 0 : i32
    %c0_i32_0 = arith.constant 0 : i32
    return %arg0, %c0_i32 : i32, i32
  }
  func.func @transform_2(%arg0: i32) -> (i32, i32) {
    %c0_i32 = arith.constant 0 : i32
    %c0_i32_0 = arith.constant 0 : i32
    return %arg0, %c0_i32 : i32, i32
  }
  func.func @transform_3(%arg0: i32) -> (i32, i32) {
    %c0_i32 = arith.constant 0 : i32
    %c0_i32_0 = arith.constant 0 : i32
    %c0_i32_1 = arith.constant 0 : i32
    return %c0_i32, %c0_i32_0 : i32, i32
  }
  func.func @transform_4(%arg0: i32) -> (i32, i32) {
    %c0_i32 = arith.constant 0 : i32
    %c0_i32_0 = arith.constant 0 : i32
    %c0_i32_1 = arith.constant 0 : i32
    return %c0_i32, %c0_i32_0 : i32, i32
  }
  func.func @transform_5(%arg0: i32) -> (i32, i32) {
    %c0_i32 = arith.constant 0 : i32
    %c0_i32_0 = arith.constant 0 : i32
    %c0_i32_1 = arith.constant 0 : i32
    return %c0_i32, %c0_i32_0 : i32, i32
  }
  func.func @transform_6(%arg0: i32) -> (i32, i32) {
    %c0_i32 = arith.constant 0 : i32
    %c0_i32_0 = arith.constant 0 : i32
    %c0_i32_1 = arith.constant 0 : i32
    return %c0_i32, %c0_i32_0 : i32, i32
  }
  func.func @transform_7(%arg0: i32) -> (i32, i32) {
    %c0_i32 = arith.constant 0 : i32
    %c0_i32_0 = arith.constant 0 : i32
    return %arg0, %c0_i32 : i32, i32
  }
}

</mosaic_0001>

<llo_original>
// kernel: tpu_custom_call.1
$region0: #{tpu_custom_call.1}
  #allocation0 [shape = 'u32[]', space=smem, size = 0x4, offset = 0x4, fixed_abs, tag = 'smem constant byte address 0x4 - core index']
  #allocation1 [shape = 'u32[72,128]{1,0:T(1,128)}', space=vmem, size = 0x9000, scoped, tag = 'internal scratch']
  %s0 = inlined_call_operand.hbm [shape: f32[16,128], index: 0, kind: input, shape index: {}]
  %s1 = inlined_call_operand.hbm [shape: f32[16,128], index: 1, kind: input, shape index: {}]
  %s2 = inlined_call_operand.hbm [shape: f32[16,1152], index: 2, kind: input, shape index: {}]
  %s3 = inlined_call_operand.vmem [shape: f32[1,9], index: 3, kind: input, shape index: {}]
  %s4 = inlined_call_operand.vmem [shape: f32[1,9], index: 4, kind: input, shape index: {}]
  %s5 = inlined_call_operand.hbm [shape: f32[9,128], index: 5, kind: input, shape index: {}]
  %s6 = inlined_call_operand.vmem [shape: f32[1,4], index: 6, kind: input, shape index: {}]
  %s7 = inlined_call_operand.vmem [shape: f32[16,4], index: 7, kind: output, shape index: {}]
  %s8 = sld [smem:[#allocation0]]
  $region77: #{tpu_custom_call.1} parent=0
    _
  %s10 = ssub.s32 1, %s8
  %s11 = scalar_select 0, %s10, %s8
  $region1: #{tpu_custom_call.1} parent=0
    #allocation2 [shape = 'u8[8192]{0}', space=vmem, size = 0x2000, scoped, tag = 'input window, operand 0']
    #allocation3 [shape = 's32[2]{0}', space=sflag, size = 0x8, scoped, tag = 'scoped memory for tpu_custom_call.1']
    #allocation4 [shape = 'u8[8192]{0}', space=vmem, size = 0x2000, scoped, tag = 'input window, operand 1']
    #allocation5 [shape = 's32[2]{0}', space=sflag, size = 0x8, scoped, tag = 'scoped memory for tpu_custom_call.1']
    #allocation6 [shape = 'u8[73728]{0}', space=vmem, size = 0x12000, scoped, tag = 'input window, operand 2']
    #allocation7 [shape = 'u8[8192]{0}', space=vmem, size = 0x2000, scoped, tag = 'input window, operand 5, single buffered']
    #allocation8 [shape = 's32[1]{0}', space=sflag, size = 0x4, scoped, tag = 'scoped memory for tpu_custom_call.1']
    %12 = vsyncpa [#allocation3], 0
    %s13 = scalar_lea.sflag [#allocation3], 1
    %14 = vsyncpa %s13, 0
    %15 = vsyncpa [#allocation5], 0
    %s16 = scalar_lea.sflag [#allocation5], 1
    %17 = vsyncpa %s16, 0
    %18 = vsyncpa [#allocation8], 0
    loop: start=0, step=1, limit=4
    $region2: #{tpu_custom_call.1} parent=1 // loop_pre_header
      _
    $region3: #{tpu_custom_call.1} parent=1 // loop_header
      %s20 = sphi 0, %s24
      %p21 = scmp.ge.s32.totalorder %s20, 4
      %s30 = sphi 0, %s32
      %s33 = sphi 0, %s30
      %s34 = sphi 0, %s33
      %s50 = sphi 0, %s34
      %s56 = sphi 0, %s58
      %s59 = sphi 0, %s56
      %s60 = sphi 0, %s59
      %s76 = sphi 0, %s60
      %s82 = sphi 0, %s84
      %s85 = sphi 0, %s82
      %s86 = sphi 0, %s85
      %s102 = sphi 0, %s86
      %s106 = sphi 0, %s106
      %s108 = sphi 0, %s106
      %s109 = sphi 0, %s108
      %s123 = sphi 0, %s109
      %s127 = sphi 0, %s127
      %s129 = sphi 0, %s127
      %s130 = sphi 0, %s129
      %s144 = sphi 0, %s130
      %s148 = sphi 0, %s148
      %s150 = sphi 0, %s148
      %s151 = sphi 0, %s150
      %s165 = sphi 0, %s151
      %s169 = sphi 0, %s169
      %s171 = sphi 0, %s169
      %s172 = sphi 0, %s171
      %s186 = sphi 0, %s172
      %s192 = sphi 0, %s194
      %s195 = sphi 0, %s192
      %s196 = sphi 0, %s195
      %s212 = sphi 0, %s196
    $region4: #{tpu_custom_call.1} parent=1 // loop_header_branch
      %23 = sbr.rel (%p21) target = $region8
    $region5: #{tpu_custom_call.1} parent=1 // loop_body
      %s25 = ssub.s32 %s20, 1
      %s26 = ssub.s32 %s20, 2
      %s27 = sadd.s32 %s20, 1
      %s28 = ssub.s32 %s20, %s27
      %p29 = scmp.eq.s32.totalorder %s28, 0
      %s31 = sadd.s32 %s30, 1
      %s32 = scalar_select %p29, %s30, %s31
      %p35 = pneg %p29
      %p36 = scmp.eq.s32.totalorder %s20, 1
      %p37 = por %p35, %p36
      %p38 = scmp.ne.s32.totalorder %s30, %s33
      %p39 = scmp.eq.s32.totalorder %s20, 0
      %p40 = por %p38, %p39
      %p41 = scmp.ne.s32.totalorder %s30, %s33
      %p42 = scmp.eq.s32.totalorder %s25, 1
      %p43 = por %p41, %p42
      %p44 = scmp.ne.s32.totalorder %s33, %s34
      %p45 = scmp.eq.s32.totalorder %s25, 0
      %p46 = por %p44, %p45
      %p47 = scmp.ne.s32.totalorder %s33, %s34
      %p48 = scmp.eq.s32.totalorder %s26, 1
      %p49 = por %p47, %p48
      %p51 = scmp.ne.s32.totalorder %s34, %s50
      %p52 = scmp.eq.s32.totalorder %s26, 0
      %p53 = por %p51, %p52
      %s54 = ssub.s32 %s20, %s27
      %p55 = scmp.eq.s32.totalorder %s54, 0
      %s57 = sadd.s32 %s56, 1
      %s58 = scalar_select %p55, %s56, %s57
      %p61 = pneg %p55
      %p62 = scmp.eq.s32.totalorder %s20, 1
      %p63 = por %p61, %p62
      %p64 = scmp.ne.s32.totalorder %s56, %s59
      %p65 = scmp.eq.s32.totalorder %s20, 0
      %p66 = por %p64, %p65
      %p67 = scmp.ne.s32.totalorder %s56, %s59
      %p68 = scmp.eq.s32.totalorder %s25, 1
      %p69 = por %p67, %p68
      %p70 = scmp.ne.s32.totalorder %s59, %s60
      %p71 = scmp.eq.s32.totalorder %s25, 0
      %p72 = por %p70, %p71
      %p73 = scmp.ne.s32.totalorder %s59, %s60
      %p74 = scmp.eq.s32.totalorder %s26, 1
      %p75 = por %p73, %p74
      %p77 = scmp.ne.s32.totalorder %s60, %s76
      %p78 = scmp.eq.s32.totalorder %s26, 0
      %p79 = por %p77, %p78
      %s80 = ssub.s32 %s20, %s27
      %p81 = scmp.eq.s32.totalorder %s80, 0
      %s83 = sadd.s32 %s82, 1
      %s84 = scalar_select %p81, %s82, %s83
      %p87 = pneg %p81
      %p88 = scmp.eq.s32.totalorder %s20, 1
      %p89 = por %p87, %p88
      %p90 = scmp.ne.s32.totalorder %s82, %s85
      %p91 = scmp.eq.s32.totalorder %s20, 0
      %p92 = por %p90, %p91
      %p93 = scmp.ne.s32.totalorder %s82, %s85
      %p94 = scmp.eq.s32.totalorder %s25, 1
      %p95 = por %p93, %p94
      %p96 = scmp.ne.s32.totalorder %s85, %s86
      %p97 = scmp.eq.s32.totalorder %s25, 0
      %p98 = por %p96, %p97
      %p99 = scmp.ne.s32.totalorder %s85, %s86
      %p100 = scmp.eq.s32.totalorder %s26, 1
      %p101 = por %p99, %p100
      %p103 = scmp.ne.s32.totalorder %s86, %s102
      %p104 = scmp.eq.s32.totalorder %s26, 0
      %p105 = por %p103, %p104
      %s107 = sadd.s32 %s106, 1
      %p110 = scmp.eq.s32.totalorder %s20, 1
      %p111 = scmp.ne.s32.totalorder %s106, %s108
      %p112 = scmp.eq.s32.totalorder %s20, 0
      %p113 = por %p111, %p112
      %p114 = scmp.ne.s32.totalorder %s106, %s108
      %p115 = scmp.eq.s32.totalorder %s25, 1
      %p116 = por %p114, %p115
      %p117 = scmp.ne.s32.totalorder %s108, %s109
      %p118 = scmp.eq.s32.totalorder %s25, 0
      %p119 = por %p117, %p118
      %p120 = scmp.ne.s32.totalorder %s108, %s109
      %p121 = scmp.eq.s32.totalorder %s26, 1
      %p122 = por %p120, %p121
      %p124 = scmp.ne.s32.totalorder %s109, %s123
      %p125 = scmp.eq.s32.totalorder %s26, 0
      %p126 = por %p124, %p125
      %s128 = sadd.s32 %s127, 1
      %p131 = scmp.eq.s32.totalorder %s20, 1
      %p132 = scmp.ne.s32.totalorder %s127, %s129
      %p133 = scmp.eq.s32.totalorder %s20, 0
      %p134 = por %p132, %p133
      %p135 = scmp.ne.s32.totalorder %s127, %s129
      %p136 = scmp.eq.s32.totalorder %s25, 1
      %p137 = por %p135, %p136
      %p138 = scmp.ne.s32.totalorder %s129, %s130
      %p139 = scmp.eq.s32.totalorder %s25, 0
      %p140 = por %p138, %p139
      %p141 = scmp.ne.s32.totalorder %s129, %s130
      %p142 = scmp.eq.s32.totalorder %s26, 1
      %p143 = por %p141, %p142
      %p145 = scmp.ne.s32.totalorder %s130, %s144
      %p146 = scmp.eq.s32.totalorder %s26, 0
      %p147 = por %p145, %p146
      %s149 = sadd.s32 %s148, 1
      %p152 = scmp.eq.s32.totalorder %s20, 1
      %p153 = scmp.ne.s32.totalorder %s148, %s150
      %p154 = scmp.eq.s32.totalorder %s20, 0
      %p155 = por %p153, %p154
      %p156 = scmp.ne.s32.totalorder %s148, %s150
      %p157 = scmp.eq.s32.totalorder %s25, 1
      %p158 = por %p156, %p157
      %p159 = scmp.ne.s32.totalorder %s150, %s151
      %p160 = scmp.eq.s32.totalorder %s25, 0
      %p161 = por %p159, %p160
      %p162 = scmp.ne.s32.totalorder %s150, %s151
      %p163 = scmp.eq.s32.totalorder %s26, 1
      %p164 = por %p162, %p163
      %p166 = scmp.ne.s32.totalorder %s151, %s165
      %p167 = scmp.eq.s32.totalorder %s26, 0
      %p168 = por %p166, %p167
      %s170 = sadd.s32 %s169, 1
      %p173 = scmp.eq.s32.totalorder %s20, 1
      %p174 = scmp.ne.s32.totalorder %s169, %s171
      %p175 = scmp.eq.s32.totalorder %s20, 0
      %p176 = por %p174, %p175
      %p177 = scmp.ne.s32.totalorder %s169, %s171
      %p178 = scmp.eq.s32.totalorder %s25, 1
      %p179 = por %p177, %p178
      %p180 = scmp.ne.s32.totalorder %s171, %s172
      %p181 = scmp.eq.s32.totalorder %s25, 0
      %p182 = por %p180, %p181
      %p183 = scmp.ne.s32.totalorder %s171, %s172
      %p184 = scmp.eq.s32.totalorder %s26, 1
      %p185 = por %p183, %p184
      %p187 = scmp.ne.s32.totalorder %s172, %s186
      %p188 = scmp.eq.s32.totalorder %s26, 0
      %p189 = por %p187, %p188
      %s190 = ssub.s32 %s20, %s27
      %p191 = scmp.eq.s32.totalorder %s190, 0
      %s193 = sadd.s32 %s192, 1
      %s194 = scalar_select %p191, %s192, %s193
      %p197 = pneg %p191
      %p198 = scmp.eq.s32.totalorder %s20, 1
      %p199 = por %p197, %p198
      %p200 = scmp.ne.s32.totalorder %s192, %s195
      %p201 = scmp.eq.s32.totalorder %s20, 0
      %p202 = por %p200, %p201
      %p203 = scmp.ne.s32.totalorder %s192, %s195
      %p204 = scmp.eq.s32.totalorder %s25, 1
      %p205 = por %p203, %p204
      %p206 = scmp.ne.s32.totalorder %s195, %s196
      %p207 = scmp.eq.s32.totalorder %s25, 0
      %p208 = por %p206, %p207
      %p209 = scmp.ne.s32.totalorder %s195, %s196
      %p210 = scmp.eq.s32.totalorder %s26, 1
      %p211 = por %p209, %p210
      %p213 = scmp.ne.s32.totalorder %s196, %s212
      %p214 = scmp.eq.s32.totalorder %s26, 0
      %p215 = por %p213, %p214
      %p216 = scmp.le.s32.totalorder 1, %s20
      %p217 = scmp.lt.s32.totalorder %s20, 3
      %p218 = pnand %p216, %p217
      %p219 = pneg %p218
      // Predicated region
      $region9: #{tpu_custom_call.1} parent=5 // pred_check
        _
      $region10: #{tpu_custom_call.1} parent=5 // pred_check_branch
        %221 = sbr.rel (%p218) target = $region12
      $region11: #{tpu_custom_call.1} parent=5 // pred_region
        %s222 = ssub.s32 %s20, 1
        // Predicated region
        $region13: #{tpu_custom_call.1} parent=11 // pred_check
          %p223 = pneg %p119
        $region14: #{tpu_custom_call.1} parent=11 // pred_check_branch
          %225 = sbr.rel (%p223) target = $region16
        $region15: #{tpu_custom_call.1} parent=11 // pred_region
          _
        $region16: #{tpu_custom_call.1} parent=11 // pred_fallthru
          _
        // Predicated region
        $region17: #{tpu_custom_call.1} parent=11 // pred_check
          %p226 = pneg %p140
        $region18: #{tpu_custom_call.1} parent=11 // pred_check_branch
          %228 = sbr.rel (%p226) target = $region20
        $region19: #{tpu_custom_call.1} parent=11 // pred_region
          _
        $region20: #{tpu_custom_call.1} parent=11 // pred_fallthru
          _
        // Predicated region
        $region21: #{tpu_custom_call.1} parent=11 // pred_check
          %p229 = pneg %p161
        $region22: #{tpu_custom_call.1} parent=11 // pred_check_branch
          %231 = sbr.rel (%p229) target = $region24
        $region23: #{tpu_custom_call.1} parent=11 // pred_region
          %233 = vsyncadd [#allocation8], 0
          %s234 = sshll.u32 %s5, 4
          %s235 = int_to_ptr.hbm [resolvable:$true] %s234
          %s236 = sshll.u32 [#allocation7], 4
          %s237 = int_to_ptr.vmem [resolvable:$true] %s236
          %242 = dma.hbm_to_vmem [thread:$0]  %s235, 256, %s237, [#allocation8], 128, 128, 8
        $region24: #{tpu_custom_call.1} parent=11 // pred_fallthru
          _
        // Predicated region
        $region25: #{tpu_custom_call.1} parent=11 // pred_check
          %p243 = pneg %p182
        $region26: #{tpu_custom_call.1} parent=11 // pred_check_branch
          %245 = sbr.rel (%p243) target = $region28
        $region27: #{tpu_custom_call.1} parent=11 // pred_region
          _
        $region28: #{tpu_custom_call.1} parent=11 // pred_fallthru
          _
      $region12: #{tpu_custom_call.1} parent=5 // pred_fallthru
        _
      %p246 = scmp.lt.s32.totalorder %s20, 2
      // Predicated region
      $region29: #{tpu_custom_call.1} parent=5 // pred_check
        %p247 = pneg %p246
      $region30: #{tpu_custom_call.1} parent=5 // pred_check_branch
        %249 = sbr.rel (%p247) target = $region32
      $region31: #{tpu_custom_call.1} parent=5 // pred_region
        // Predicated region
        $region33: #{tpu_custom_call.1} parent=31 // pred_check
          %p250 = pneg %p40
        $region34: #{tpu_custom_call.1} parent=31 // pred_check_branch
          %252 = sbr.rel (%p250) target = $region36
        $region35: #{tpu_custom_call.1} parent=31 // pred_region
          %s253 = sand.u32 %s30, 1
          %s254 = scalar_lea.sflag [#allocation3], %s253
          %s255 = sand.u32 %s30, 1
          %s256 = smul.addr %s255, 8
          %s257 = scalar_lea.vmem [#allocation2], %s256
          %259 = vsyncadd %s254, 0
          %s260 = smul.addr %s20, 8
          %s261 = scalar_lea.hbm %s0, %s260
          %s263 = sshll.u32 %s261, 4
          %s264 = int_to_ptr.hbm [resolvable:$true] %s263
          %s265 = sshll.u32 %s257, 4
          %s266 = int_to_ptr.vmem [resolvable:$true] %s265
          %268 = dma.hbm_to_vmem [thread:$0]  %s264, 128, %s266, %s254
        $region36: #{tpu_custom_call.1} parent=31 // pred_fallthru
          _
        // Predicated region
        $region37: #{tpu_custom_call.1} parent=31 // pred_check
          %p269 = pneg %p66
        $region38: #{tpu_custom_call.1} parent=31 // pred_check_branch
          %271 = sbr.rel (%p269) target = $region40
        $region39: #{tpu_custom_call.1} parent=31 // pred_region
          %s272 = sand.u32 %s20, 1
          %s273 = scalar_lea.sflag [#allocation5], %s272
          %s274 = sand.u32 %s56, 1
          %s275 = smul.addr %s274, 8
          %s276 = scalar_lea.vmem [#allocation4], %s275
          %278 = vsyncadd %s273, 0
          %s279 = smul.addr %s20, 8
          %s280 = scalar_lea.hbm %s1, %s279
          %s282 = sshll.u32 %s280, 4
          %s283 = int_to_ptr.hbm [resolvable:$true] %s282
          %s284 = sshll.u32 %s276, 4
          %s285 = int_to_ptr.vmem [resolvable:$true] %s284
          %287 = dma.hbm_to_vmem [thread:$0]  %s283, 128, %s285, %s273
        $region40: #{tpu_custom_call.1} parent=31 // pred_fallthru
          _
        // Predicated region
        $region41: #{tpu_custom_call.1} parent=31 // pred_check
          %p288 = pneg %p92
        $region42: #{tpu_custom_call.1} parent=31 // pred_check_branch
          %290 = sbr.rel (%p288) target = $region44
        $region43: #{tpu_custom_call.1} parent=31 // pred_region
          %s291 = sand.u32 %s20, 1
          %s292 = scalar_lea.sflag [#allocation5], %s291
          %s293 = sand.u32 %s82, 1
          %s294 = smul.addr %s293, 72
          %s295 = scalar_lea.vmem [#allocation6], %s294
          %297 = vsyncadd %s292, 0
          %s298 = smul.addr %s20, 9
          %s299 = smul.addr %s298, 8
          %s300 = scalar_lea.hbm %s2, %s299
          %s302 = sshll.u32 %s300, 4
          %s303 = int_to_ptr.hbm [resolvable:$true] %s302
          %s304 = sshll.u32 %s295, 4
          %s305 = int_to_ptr.vmem [resolvable:$true] %s304
          %307 = dma.hbm_to_vmem [thread:$0]  %s303, 1152, %s305, %s292
        $region44: #{tpu_custom_call.1} parent=31 // pred_fallthru
          _
      $region32: #{tpu_custom_call.1} parent=5 // pred_fallthru
        _
      %p308 = scmp.le.s32.totalorder 1, %s20
      %p309 = scmp.lt.s32.totalorder %s20, 3
      %p310 = pnand %p308, %p309
      %p311 = pneg %p310
      // Predicated region
      $region45: #{tpu_custom_call.1} parent=5 // pred_check
        _
      $region46: #{tpu_custom_call.1} parent=5 // pred_check_branch
        %313 = sbr.rel (%p310) target = $region48
      $region47: #{tpu_custom_call.1} parent=5 // pred_region
        %s314 = ssub.s32 %s20, 1
        %s315 = sand.u32 %s33, 1
        %s316 = scalar_lea.sflag [#allocation3], %s315
        %s317 = sand.u32 %s33, 1
        %s318 = smul.addr %s317, 8
        %s319 = scalar_lea.vmem [#allocation2], %s318
        // Predicated region
        $region49: #{tpu_custom_call.1} parent=47 // pred_check
          %p320 = pneg %p46
        $region50: #{tpu_custom_call.1} parent=47 // pred_check_branch
          %322 = sbr.rel (%p320) target = $region52
        $region51: #{tpu_custom_call.1} parent=47 // pred_region
          %324 = dma.done %s316, 128
        $region52: #{tpu_custom_call.1} parent=47 // pred_fallthru
          _
        %s325 = sand.u32 %s25, 1
        %s326 = scalar_lea.sflag [#allocation5], %s325
        %s327 = sand.u32 %s59, 1
        %s328 = smul.addr %s327, 8
        %s329 = scalar_lea.vmem [#allocation4], %s328
        // Predicated region
        $region53: #{tpu_custom_call.1} parent=47 // pred_check
          %p330 = pneg %p72
        $region54: #{tpu_custom_call.1} parent=47 // pred_check_branch
          %332 = sbr.rel (%p330) target = $region56
        $region55: #{tpu_custom_call.1} parent=47 // pred_region
          %334 = dma.done %s326, 128
        $region56: #{tpu_custom_call.1} parent=47 // pred_fallthru
          _
        %s335 = sand.u32 %s25, 1
        %s336 = scalar_lea.sflag [#allocation5], %s335
        %s337 = sand.u32 %s85, 1
        %s338 = smul.addr %s337, 72
        %s339 = scalar_lea.vmem [#allocation6], %s338
        // Predicated region
        $region57: #{tpu_custom_call.1} parent=47 // pred_check
          %p340 = pneg %p98
        $region58: #{tpu_custom_call.1} parent=47 // pred_check_branch
          %342 = sbr.rel (%p340) target = $region60
        $region59: #{tpu_custom_call.1} parent=47 // pred_region
          %344 = dma.done %s336, 1152
        $region60: #{tpu_custom_call.1} parent=47 // pred_fallthru
          _
        // Predicated region
        $region61: #{tpu_custom_call.1} parent=47 // pred_check
          %p345 = pneg %p161
        $region62: #{tpu_custom_call.1} parent=47 // pred_check_branch
          %347 = sbr.rel (%p345) target = $region64
        $region63: #{tpu_custom_call.1} parent=47 // pred_region
          %349 = dma.done [#allocation8], 256
        $region64: #{tpu_custom_call.1} parent=47 // pred_fallthru
          _
        %s350 = sand.u32 %s33, 1
        %s351 = scalar_lea.sflag [#allocation3], %s350
        %s352 = sand.u32 %s33, 1
        %s353 = smul.addr %s352, 8
        %s354 = scalar_lea.vmem [#allocation2], %s353
        %p355 = pneg %p46
        %p356 = pneg %p43
        %s357 = sand.u32 %s25, 1
        %s358 = scalar_lea.sflag [#allocation5], %s357
        %s359 = sand.u32 %s59, 1
        %s360 = smul.addr %s359, 8
        %s361 = scalar_lea.vmem [#allocation4], %s360
        %p362 = pneg %p72
        %p363 = pneg %p69
        %s364 = sand.u32 %s25, 1
        %s365 = scalar_lea.sflag [#allocation5], %s364
        %s366 = sand.u32 %s85, 1
        %s367 = smul.addr %s366, 72
        %s368 = scalar_lea.vmem [#allocation6], %s367
        %p369 = pneg %p98
        %p370 = pneg %p95
        %p371 = pneg %p119
        %p372 = pneg %p116
        %p373 = pneg %p140
        %p374 = pneg %p137
        %p375 = pneg %p161
        %p376 = pneg %p158
        %p377 = pneg %p182
        %p378 = pneg %p179
        %p379 = pneg %p208
        %p380 = pneg %p205
        %p381 = scmp.lt.s32.totalorder %s25, 1
        %s382 = scalar_select %p381, %s25, 1
        %s383 = smul.addr %s382, 8
        %s384 = scalar_lea.vmem %s7, %s383
        %p385 = scmp.lt.s32.totalorder %s25, 1
        %s386 = scalar_select %p385, %s25, 1
        %s387 = smul.addr %s386, 8
        %s388 = scalar_lea.vmem %s7, %s387
        %v389 = vld [vmem:[%s319] sm:$0xff]
        %v390 = vld [vmem:[%s329] sm:$0xff]
        %v391 = vld [vmem:[%s339] sm:$0xff]
        %v392 = vmul.f32 %v389, %v391
        %393 = vadd.xlane.f32.xlu0 %v392
        %v394 = vpop.xlane.xlu0 %393
        %v395 = vld [vmem:[%s339 + $0x8] sm:$0xff]
        %v396 = vmul.f32 %v389, %v395
        %397 = vadd.xlane.f32.xlu0 %v396
        %v398 = vpop.xlane.xlu0 %397
        %v399 = vld [vmem:[%s339 + $0x10] sm:$0xff]
        %v400 = vmul.f32 %v389, %v399
        %401 = vadd.xlane.f32.xlu0 %v400
        %v402 = vpop.xlane.xlu0 %401
        %v403 = vld [vmem:[%s339 + $0x18] sm:$0xff]
        %v404 = vmul.f32 %v390, %v403
        %405 = vadd.xlane.f32.xlu0 %v404
        %v406 = vpop.xlane.xlu0 %405
        %v407 = vld [vmem:[%s339 + $0x20] sm:$0xff]
        %v408 = vmul.f32 %v390, %v407
        %409 = vadd.xlane.f32.xlu0 %v408
        %v410 = vpop.xlane.xlu0 %409
        %v411 = vld [vmem:[%s339 + $0x28] sm:$0xff]
        %v412 = vmul.f32 %v390, %v411
        %413 = vadd.xlane.f32.xlu0 %v412
        %v414 = vpop.xlane.xlu0 %413
        %v415 = vld [vmem:[%s339 + $0x30] sm:$0xff]
        %v416 = vmul.f32 %v390, %v415
        %417 = vadd.xlane.f32.xlu0 %v416
        %v418 = vpop.xlane.xlu0 %417
        %v419 = vld [vmem:[%s339 + $0x38] sm:$0xff]
        %v420 = vmul.f32 %v390, %v419
        %421 = vadd.xlane.f32.xlu0 %v420
        %v422 = vpop.xlane.xlu0 %421
        %v423 = vld [vmem:[%s339 + $0x40] sm:$0xff]
        %v424 = vmul.f32 %v390, %v423
        %425 = vadd.xlane.f32.xlu0 %v424
        %v426 = vpop.xlane.xlu0 %425
        %vm427 = vcmask 7168
        %v428 = vsel %vm427, %v394, %v398
        %vm429 = vcmask 15360
        %v430 = vsel %vm429, %v428, %v402
        %vm431 = vcmask 23552
        %v432 = vsel %vm431, %v430, %v406
        %vm433 = vcmask 31744
        %v434 = vsel %vm433, %v432, %v410
        %vm435 = vcmask 39936
        %v436 = vsel %vm435, %v434, %v414
        %vm437 = vcmask 48128
        %v438 = vsel %vm437, %v436, %v418
        %vm439 = vcmask 56320
        %v440 = vsel %vm439, %v438, %v422
        %vm441 = vcmask 64512
        %v442 = vsel %vm441, %v440, %v426
        %vm443 = vcmask 72704
        %v444 = vsel %vm443, %v442, 0.0
        %445 = vadd.xlane.f32.xlu0 %v444
        %v446 = vpop.xlane.xlu0 %445
        %v447 = vrcp.pop 9.0
        %v448 = vmul.f32 9.0, %v447
        %v449 = vsub.f32 1.0, %v448
        %v450 = vmul.f32 %v447, %v449
        %v451 = vadd.f32 %v447, %v450
        %vm452 = vweird.f32 %v447
        %v453 = vsel %vm452, %v447, %v451
        %v454 = vmul.f32 %v446, %v453
        %v455 = vsub.f32 %v442, %v454
        %v456 = vmul.f32 %v455, %v455
        %v457 = vsel %vm443, %v456, 0.0
        %458 = vadd.xlane.f32.xlu0 %v457
        %v459 = vpop.xlane.xlu0 %458
        %v460 = vmul.f32 %v459, %v453
        %v461 = vadd.f32 %v460, 1e-06
        %v462 = vrsqrt.pop %v461
        %v463 = vmul.f32 %v462, %v461
        %v464 = vmul.f32 %v463, %v462
        %v465 = vmul.f32 0.5, %v464
        %v466 = vsub.f32 1.5, %v465
        %v467 = vmul.f32 %v462, %v466
        %vm468 = vweird.f32 %v461
        %vm469 = vweird.f32 %v462
        %vm470 = vmor %vm468, %vm469
        %v471 = vsel %vm470, %v462, %v467
        %v472 = vmul.f32 %v455, %v471
        %v473 = vld [vmem:[%s3] sm:$0x1]
        %v475 = vperm.slane %v473, 0
        %v477 = vmul.f32 %v472, %v475
        %v478 = vld [vmem:[%s4] sm:$0x1]
        %v480 = vperm.slane %v478, 0
        %v482 = vadd.f32 %v477, %v480
        %v483 = vld [vmem:[#allocation7] sm:$0xff]
        %v484 = vld [vmem:[#allocation7 + $0x8] sm:$0x1]
        %v486 = vsel %vm443, %v482, 0
        %vm488 = vcmask 1040384
        %v490 = vsel %vm488, %v484, 0
        %492 = vmatpush.msra.mxu0 0.0
        %493 = vmatpush.msra.mxu0 0.0
        %494 = vmatpush.msra.mxu0 0.0
        %495 = vmatpush.msra.mxu0 0.0
        %496 = vmatpush.msra.mxu0 0.0
        %497 = vmatpush.msra.mxu0 0.0
        %498 = vmatpush.msra.mxu0 0.0
        %499 = vmatpush.msra.mxu0 0.0
        %500 = vmatpush.msra.mxu0 0.0
        %501 = vmatpush.msra.mxu0 0.0
        %502 = vmatpush.msra.mxu0 0.0
        %503 = vmatpush.msra.mxu0 0.0
        %504 = vmatpush.msra.mxu0 0.0
        %505 = vmatpush.msra.mxu0 0.0
        %506 = vmatpush.msra.mxu0 %v490
        %507 = vmatpush.msra.mxu0 %v483
        %508 = vmatmul.f32.gmra.mxu0 %v486
        %v509 = vpop.f32.mrf.mxu0
        %v510 = vadd.f32 0.0, %v509
        %511 = vdwg.mxu0
        %v512 = vld [vmem:[%s6] sm:$0x1]
        %v514 = vperm.slane %v512, 0
        %v516 = vadd.f32 %v510, %v514
        %517 = vst.msk [vmem:[%s388] sm:$0xff] %vm433, %v516
        %p518 = scmp.lt.s32.totalorder %s25, 1
        %s519 = scalar_select %p518, %s25, 1
        %s520 = smul.addr %s519, 8
        %s521 = scalar_lea.vmem %s7, %s520
        // Predicated region
        $region65: #{tpu_custom_call.1} parent=47 // pred_check
          %p522 = pneg %p205
        $region66: #{tpu_custom_call.1} parent=47 // pred_check_branch
          %524 = sbr.rel (%p522) target = $region68
        $region67: #{tpu_custom_call.1} parent=47 // pred_region
          _
        $region68: #{tpu_custom_call.1} parent=47 // pred_fallthru
          _
      $region48: #{tpu_custom_call.1} parent=5 // pred_fallthru
        _
      %p525 = scmp.le.s32.totalorder 2, %s20
      // Predicated region
      $region69: #{tpu_custom_call.1} parent=5 // pred_check
        %p526 = pneg %p525
      $region70: #{tpu_custom_call.1} parent=5 // pred_check_branch
        %528 = sbr.rel (%p526) target = $region72
      $region71: #{tpu_custom_call.1} parent=5 // pred_region
        %s529 = ssub.s32 %s20, 2
        // Predicated region
        $region73: #{tpu_custom_call.1} parent=71 // pred_check
          %p530 = pneg %p211
        $region74: #{tpu_custom_call.1} parent=71 // pred_check_branch
          %532 = sbr.rel (%p530) target = $region76
        $region75: #{tpu_custom_call.1} parent=71 // pred_region
          %p533 = scmp.lt.s32.totalorder %s26, 1
          %s534 = scalar_select %p533, %s26, 1
          %s535 = smul.addr %s534, 8
          %s536 = scalar_lea.vmem %s7, %s535
        $region76: #{tpu_custom_call.1} parent=71 // pred_fallthru
          _
      $region72: #{tpu_custom_call.1} parent=5 // pred_fallthru
        _
    $region6: #{tpu_custom_call.1} parent=1 // loop_footer
      %s24 = sadd.s32 1, %s20
    $region7: #{tpu_custom_call.1} parent=1 // loop_footer_branch
      %19 = sbr.rel target = $region3
    $region8: #{tpu_custom_call.1} parent=1 // loop_exit
      _
    %537 = vsyncpa [#allocation3], 1
    %s538 = scalar_lea.sflag [#allocation3], 1
    %539 = vsyncpa %s538, 1
    %540 = vsyncpa [#allocation5], 1
    %s541 = scalar_lea.sflag [#allocation5], 1
    %542 = vsyncpa %s541, 1
    %543 = vsyncpa [#allocation8], 1

</llo_original>
